<compile_context>
chip_gen: v5e
topology: v5e:2x2
jax: 0.10.0
libtpu: 0.0.40
codegen_flags: <defaults>
</compile_context>

<pallas_src>
import functools

import jax
import jax.numpy as jnp
from jax.experimental import pallas as pl
from jax.experimental.pallas import tpu as pltpu


_TARGET_OUT_TILE_BYTES = 8 * 1024 * 1024     # ~8 MiB output tile per grid step
_VMEM_LIMIT_BYTES = 48 * 1024 * 1024         # explicit scoped-VMEM budget
_LANE_CANDIDATES = tuple(range(1024, 0, -128))   # 1024, 896, ..., 128
_DEFAULT_LANE_WIDTH = 512                    # fallback (requires tail padding)
_REANCHOR_EVERY = 4                          # exact sin/cos every 4 octaves


def _pe_kernel(x_ref, o_ref, *, degrees, include_inputs):
    """Positional-encode one lane-dense (TM, L) slab of the flat input stream.

    o_ref has shape (n_fns, TM, L); embedding function k is written directly to
    o_ref[k].  Only the anchor octaves hit sin/cos; the octaves in between use
    the VPU-only double-angle recurrence, all in f32.
    """
    x = x_ref[...]                           # (TM, L), input dtype
    x32 = x.astype(jnp.float32)              # recurrence always in f32
    out_dtype = o_ref.dtype

    k = 0
    if include_inputs:
        o_ref[k] = x                         # identity part, no cast needed
        k += 1

    s = c = None
    for d in range(degrees):
        if d % _REANCHOR_EVERY == 0:
            # Re-anchor: frequencies are exact powers of two, so x * 2**d is an
            # exact scaling and this bounds the recurrence error accumulation.
            xd = x32 * (2.0 ** d)
            s = jnp.sin(xd)
            c = jnp.cos(xd)
        else:
            # Double-angle recurrence (VPU only): sin(2a)=2sc, cos(2a)=(c-s)(c+s).
            s, c = 2.0 * s * c, (c - s) * (c + s)
        o_ref[k] = s.astype(out_dtype)
        o_ref[k + 1] = c.astype(out_dtype)
        k += 2


def _choose_lane_width(n_elems):
    """Largest multiple of 128 (<=1024) dividing n_elems, else fallback+pad."""
    for lw in _LANE_CANDIDATES:
        if n_elems % lw == 0:
            return lw, False
    return _DEFAULT_LANE_WIDTH, True


def positional_encode(inputs, degrees, include_inputs=True,
                      interleave_channels=True):
    """JAX/Pallas equivalent of PositionalEncoder.forward.

    inputs: array of shape (..., in_channels)
    interleave_channels=True  -> (..., in_channels * n_fns) in the reference
        torch.cat channel order [x, sin(f0 x), cos(f0 x), sin(f1 x), ...].
    interleave_channels=False -> (n_fns, ..., in_channels) producer layout
        (lane-dense, no reorder pass); fold the permutation into the consumer
        (e.g. reshape the first MLP weight to (n_fns, C, W)) for free.
    """
    assert degrees >= 1, "degrees must be >= 1"
    in_channels = inputs.shape[-1]
    n_fns = (1 if include_inputs else 0) + 2 * degrees
    out_channels = in_channels * n_fns
    orig_shape = inputs.shape
    dtype = inputs.dtype
    itemsize = jnp.dtype(dtype).itemsize

    # --- lane-dense restructure: whole input as a 1-D stream, tiled (rows, L).
    x_flat = inputs.reshape(-1)
    n_elems = x_flat.shape[0]
    L, needs_pad = _choose_lane_width(n_elems)
    if needs_pad:
        # TODO(synk): this pads <L elements but still copies the whole input in
        # HBM; a ragged-tail handler inside the kernel would remove the copy.
        padded = pl.cdiv(n_elems, L) * L
        x_flat = jnp.pad(x_flat, (0, padded - n_elems))
    n_rows = x_flat.shape[0] // L
    x2d = x_flat.reshape(n_rows, L)

    # dtype-aware sublane quantum: 8 (f32) / 16 (bf16) / 32 (int8, fp8).
    sublane_q = max(8, 32 // itemsize)
    bytes_per_row_out = L * itemsize * n_fns
    tile_rows = _TARGET_OUT_TILE_BYTES // max(1, bytes_per_row_out)
    tile_rows = max(sublane_q, (tile_rows // sublane_q) * sublane_q)
    if tile_rows >= n_rows:
        tile_rows = n_rows                   # single block == full extent (legal)
    grid = (pl.cdiv(n_rows, tile_rows),)     # partial last block handled by Pallas

    kernel = functools.partial(_pe_kernel, degrees=degrees,
                               include_inputs=include_inputs)

    out3d = pl.pallas_call(
        kernel,
        out_shape=jax.ShapeDtypeStruct((n_fns, n_rows, L), dtype),
        grid_spec=pltpu.PrefetchScalarGridSpec(
            num_scalar_prefetch=0,
            grid=grid,
            in_specs=[pl.BlockSpec((tile_rows, L), lambda i: (i, 0))],
            out_specs=pl.BlockSpec((n_fns, tile_rows, L), lambda i: (0, i, 0)),
        ),
        compiler_params=pltpu.CompilerParams(
            dimension_semantics=("parallel",),
            vmem_limit_bytes=_VMEM_LIMIT_BYTES,
        ),
    )(x2d)

    out_fm = out3d.reshape(n_fns, n_rows * L)
    if n_rows * L != n_elems:
        out_fm = out_fm[:, :n_elems]

    if not interleave_channels:
        # Producer layout: (n_fns, ..., C). No extra HBM pass.
        return out_fm.reshape(n_fns, *orig_shape[:-1], in_channels)

    # --- reference channel order. This is the one remaining reorder pass: a
    # C-granular (n_fns, points, C) -> (points, n_fns, C) interleave that has
    # no lane-dense TPU formulation; XLA's transpose emitter handles it.
    # TODO(synk): for real NeRF pipelines prefer interleave_channels=False and
    # fold this permutation into the first MLP layer's weights at init.
    n_points = n_elems // in_channels
    out = out_fm.reshape(n_fns, n_points, in_channels)
    out = jnp.transpose(out, (1, 0, 2)).reshape(n_points, out_channels)
    return out.reshape(*orig_shape[:-1], out_channels)


def positional_encode_ref(inputs, degrees, include_inputs=True):
    """Pure-JAX reference mirroring the PyTorch module."""
    freqs = 2.0 ** jnp.linspace(0.0, degrees - 1, degrees)
    parts = []
    if include_inputs:
        parts.append(inputs)
    for f in freqs:
        parts.append(jnp.sin(inputs * f))
        parts.append(jnp.cos(inputs * f))
    return jnp.concatenate(parts, axis=-1)


if __name__ == "__main__":
    key = jax.random.PRNGKey(0)
    k1, k2 = jax.random.split(key)

    # Case 1: small 4-channel input, degrees=4 (exercises the no-pad path:
    # 2*32*4 = 256 elements -> lane width 256 divides exactly).
    x1 = jax.random.normal(k1, (2, 32, 4), dtype=jnp.float32)
    out1 = jax.block_until_ready(positional_encode(x1, degrees=4))
    ref1 = positional_encode_ref(x1, degrees=4)
    assert out1.shape == (2, 32, 4 * (1 + 2 * 4)), out1.shape
    assert jnp.allclose(out1, ref1, atol=1e-4, rtol=1e-4), "case-1 mismatch"

    # Case 2: NeRF-typical xyz input with degrees=10 (exercises the ragged/pad
    # path and the re-anchored recurrence at high octaves). Top octave hits
    # f32 range-reduction limits in BOTH implementations, so tolerance is 1e-3.
    x2 = jax.random.uniform(k2, (2, 32, 3), dtype=jnp.float32,
                            minval=-1.0, maxval=1.0)
    out2 = jax.block_until_ready(positional_encode(x2, degrees=10))
    ref2 = positional_encode_ref(x2, degrees=10)
    assert out2.shape == (2, 32, 3 * (1 + 2 * 10)), out2.shape
    assert jnp.allclose(out2, ref2, atol=1e-3, rtol=1e-3), "case-2 mismatch"

    # Producer-layout path (review option (a)): same numbers, no reorder pass.
    prod = jax.block_until_ready(
        positional_encode(x1, degrees=4, interleave_channels=False))
    assert prod.shape == (1 + 2 * 4, 2, 32, 4), prod.shape
    assert jnp.allclose(jnp.moveaxis(prod, 0, -2).reshape(2, 32, -1), out1,
                        atol=1e-6), "producer-layout mismatch"

    print("KERNEL_OK")
</pallas_src>

<mosaic_0001>
module attributes {stable_mosaic.version = 11 : i64} {
  func.func @_pe_kernel(%arg0: i32, %arg1: memref<1x256xf32, #tpu.memory_space<vmem>>, %arg2: memref<9x1x256xf32, #tpu.memory_space<vmem>>) attributes {dimension_semantics = [#tpu.dimension_semantics<parallel>], iteration_bounds = array<i64: 1>, scalar_prefetch = 0 : i64, scratch_operands = 0 : i64, tpu.core_type = #tpu.core_type<tc>, window_params = [{transform_indices = @transform_0, window_bounds = array<i64: 1, 256>}, {transform_indices = @transform_1, window_bounds = array<i64: 9, 1, 256>}]} {
    %c0 = arith.constant 0 : index
    %c0_0 = arith.constant 0 : index
    %0 = vector.load %arg1[%c0, %c0_0] : memref<1x256xf32, #tpu.memory_space<vmem>>, vector<1x256xf32>
    %c0_1 = arith.constant 0 : index
    %c0_2 = arith.constant 0 : index
    %c0_3 = arith.constant 0 : index
    %1 = vector.load %arg2[%c0_1, %c0_2, %c0_3] : memref<9x1x256xf32, #tpu.memory_space<vmem>>, vector<1x1x256xf32>
    %2 = vector.shape_cast %1 : vector<1x1x256xf32> to vector<1x256xf32>
    %3 = vector.shape_cast %0 : vector<1x256xf32> to vector<1x1x256xf32>
    tpu.vector_store %arg2[%c0_1, %c0_2, %c0_3], %3 {strides = array<i32>} : memref<9x1x256xf32, #tpu.memory_space<vmem>>, vector<1x1x256xf32>,
    %cst = arith.constant 1.000000e+00 : f32
    %4 = vector.broadcast %cst : f32 to vector<1x256xf32>
    %5 = arith.mulf %0, %4 : vector<1x256xf32>
    %6 = math.sin %5 : vector<1x256xf32>
    %7 = math.cos %5 : vector<1x256xf32>
    %c1 = arith.constant 1 : index
    %c0_4 = arith.constant 0 : index
    %c0_5 = arith.constant 0 : index
    %8 = vector.load %arg2[%c1, %c0_4, %c0_5] : memref<9x1x256xf32, #tpu.memory_space<vmem>>, vector<1x1x256xf32>
    %9 = vector.shape_cast %8 : vector<1x1x256xf32> to vector<1x256xf32>
    %10 = vector.shape_cast %6 : vector<1x256xf32> to vector<1x1x256xf32>
    tpu.vector_store %arg2[%c1, %c0_4, %c0_5], %10 {strides = array<i32>} : memref<9x1x256xf32, #tpu.memory_space<vmem>>, vector<1x1x256xf32>,
    %c2 = arith.constant 2 : index
    %c0_6 = arith.constant 0 : index
    %c0_7 = arith.constant 0 : index
    %11 = vector.load %arg2[%c2, %c0_6, %c0_7] : memref<9x1x256xf32, #tpu.memory_space<vmem>>, vector<1x1x256xf32>
    %12 = vector.shape_cast %11 : vector<1x1x256xf32> to vector<1x256xf32>
    %13 = vector.shape_cast %7 : vector<1x256xf32> to vector<1x1x256xf32>
    tpu.vector_store %arg2[%c2, %c0_6, %c0_7], %13 {strides = array<i32>} : memref<9x1x256xf32, #tpu.memory_space<vmem>>, vector<1x1x256xf32>,
    %cst_8 = arith.constant 2.000000e+00 : f32
    %14 = vector.broadcast %cst_8 : f32 to vector<1x256xf32>
    %15 = arith.mulf %14, %6 : vector<1x256xf32>
    %16 = arith.mulf %15, %7 : vector<1x256xf32>
    %17 = arith.subf %7, %6 : vector<1x256xf32>
    %18 = arith.addf %7, %6 : vector<1x256xf32>
    %19 = arith.mulf %17, %18 : vector<1x256xf32>
    %c3 = arith.constant 3 : index
    %c0_9 = arith.constant 0 : index
    %c0_10 = arith.constant 0 : index
    %20 = vector.load %arg2[%c3, %c0_9, %c0_10] : memref<9x1x256xf32, #tpu.memory_space<vmem>>, vector<1x1x256xf32>
    %21 = vector.shape_cast %20 : vector<1x1x256xf32> to vector<1x256xf32>
    %22 = vector.shape_cast %16 : vector<1x256xf32> to vector<1x1x256xf32>
    tpu.vector_store %arg2[%c3, %c0_9, %c0_10], %22 {strides = array<i32>} : memref<9x1x256xf32, #tpu.memory_space<vmem>>, vector<1x1x256xf32>,
    %c4 = arith.constant 4 : index
    %c0_11 = arith.constant 0 : index
    %c0_12 = arith.constant 0 : index
    %23 = vector.load %arg2[%c4, %c0_11, %c0_12] : memref<9x1x256xf32, #tpu.memory_space<vmem>>, vector<1x1x256xf32>
    %24 = vector.shape_cast %23 : vector<1x1x256xf32> to vector<1x256xf32>
    %25 = vector.shape_cast %19 : vector<1x256xf32> to vector<1x1x256xf32>
    tpu.vector_store %arg2[%c4, %c0_11, %c0_12], %25 {strides = array<i32>} : memref<9x1x256xf32, #tpu.memory_space<vmem>>, vector<1x1x256xf32>,
    %cst_13 = arith.constant 2.000000e+00 : f32
    %26 = vector.broadcast %cst_13 : f32 to vector<1x256xf32>
    %27 = arith.mulf %26, %16 : vector<1x256xf32>
    %28 = arith.mulf %27, %19 : vector<1x256xf32>
    %29 = arith.subf %19, %16 : vector<1x256xf32>
    %30 = arith.addf %19, %16 : vector<1x256xf32>
    %31 = arith.mulf %29, %30 : vector<1x256xf32>
    %c5 = arith.constant 5 : index
    %c0_14 = arith.constant 0 : index
    %c0_15 = arith.constant 0 : index
    %32 = vector.load %arg2[%c5, %c0_14, %c0_15] : memref<9x1x256xf32, #tpu.memory_space<vmem>>, vector<1x1x256xf32>
    %33 = vector.shape_cast %32 : vector<1x1x256xf32> to vector<1x256xf32>
    %34 = vector.shape_cast %28 : vector<1x256xf32> to vector<1x1x256xf32>
    tpu.vector_store %arg2[%c5, %c0_14, %c0_15], %34 {strides = array<i32>} : memref<9x1x256xf32, #tpu.memory_space<vmem>>, vector<1x1x256xf32>,
    %c6 = arith.constant 6 : index
    %c0_16 = arith.constant 0 : index
    %c0_17 = arith.constant 0 : index
    %35 = vector.load %arg2[%c6, %c0_16, %c0_17] : memref<9x1x256xf32, #tpu.memory_space<vmem>>, vector<1x1x256xf32>
    %36 = vector.shape_cast %35 : vector<1x1x256xf32> to vector<1x256xf32>
    %37 = vector.shape_cast %31 : vector<1x256xf32> to vector<1x1x256xf32>
    tpu.vector_store %arg2[%c6, %c0_16, %c0_17], %37 {strides = array<i32>} : memref<9x1x256xf32, #tpu.memory_space<vmem>>, vector<1x1x256xf32>,
    %cst_18 = arith.constant 2.000000e+00 : f32
    %38 = vector.broadcast %cst_18 : f32 to vector<1x256xf32>
    %39 = arith.mulf %38, %28 : vector<1x256xf32>
    %40 = arith.mulf %39, %31 : vector<1x256xf32>
    %41 = arith.subf %31, %28 : vector<1x256xf32>
    %42 = arith.addf %31, %28 : vector<1x256xf32>
    %43 = arith.mulf %41, %42 : vector<1x256xf32>
    %c7 = arith.constant 7 : index
    %c0_19 = arith.constant 0 : index
    %c0_20 = arith.constant 0 : index
    %44 = vector.load %arg2[%c7, %c0_19, %c0_20] : memref<9x1x256xf32, #tpu.memory_space<vmem>>, vector<1x1x256xf32>
    %45 = vector.shape_cast %44 : vector<1x1x256xf32> to vector<1x256xf32>
    %46 = vector.shape_cast %40 : vector<1x256xf32> to vector<1x1x256xf32>
    tpu.vector_store %arg2[%c7, %c0_19, %c0_20], %46 {strides = array<i32>} : memref<9x1x256xf32, #tpu.memory_space<vmem>>, vector<1x1x256xf32>,
    %c8 = arith.constant 8 : index
    %c0_21 = arith.constant 0 : index
    %c0_22 = arith.constant 0 : index
    %47 = vector.load %arg2[%c8, %c0_21, %c0_22] : memref<9x1x256xf32, #tpu.memory_space<vmem>>, vector<1x1x256xf32>
    %48 = vector.shape_cast %47 : vector<1x1x256xf32> to vector<1x256xf32>
    %49 = vector.shape_cast %43 : vector<1x256xf32> to vector<1x1x256xf32>
    tpu.vector_store %arg2[%c8, %c0_21, %c0_22], %49 {strides = array<i32>} : memref<9x1x256xf32, #tpu.memory_space<vmem>>, vector<1x1x256xf32>,
    return
  }
  func.func @transform_0(%arg0: i32) -> (i32, i32) {
    %c0_i32 = arith.constant 0 : i32
    %c0_i32_0 = arith.constant 0 : i32
    return %arg0, %c0_i32 : i32, i32
  }
  func.func @transform_1(%arg0: i32) -> (i32, i32, i32) {
    %c0_i32 = arith.constant 0 : i32
    %c0_i32_0 = arith.constant 0 : i32
    %c0_i32_1 = arith.constant 0 : i32
    return %c0_i32, %arg0, %c0_i32_0 : i32, i32, i32
  }
}

</mosaic_0001>

<llo_original>
// kernel: tpu_custom_call.1
$region0: #{tpu_custom_call.1}
  #allocation0 [shape = 'u32[]', space=smem, size = 0x4, offset = 0x4, fixed_abs, tag = 'smem constant byte address 0x4 - core index']
  #allocation1 [shape = 'u32[72,128]{1,0:T(1,128)}', space=vmem, size = 0x9000, scoped, tag = 'internal scratch']
  %s0 = inlined_call_operand.hbm [shape: f32[1,256], index: 0, kind: input, shape index: {}]
  %s1 = inlined_call_operand.hbm [shape: f32[9,1,256], index: 1, kind: output, shape index: {}]
  %s2 = sld [smem:[#allocation0]]
  $region18: #{tpu_custom_call.1} parent=0
    _
  %s4 = ssub.s32 1, %s2
  %s5 = scalar_select 0, %s4, %s2
  $region1: #{tpu_custom_call.1} parent=0
    #allocation2 [shape = 'u8[1024]{0}', space=vmem, size = 0x400, scoped, tag = 'input window, operand 0, single buffered']
    #allocation3 [shape = 's32[1]{0}', space=sflag, size = 0x4, scoped, tag = 'scoped memory for tpu_custom_call.1']
    #allocation4 [shape = 's32[1]{0}', space=sflag, size = 0x4, scoped, tag = 'scoped memory for tpu_custom_call.1']
    #allocation5 [shape = 'u8[9216]{0}', space=vmem, size = 0x2400, scoped, tag = 'output window, operand 0, single buffered']
    %6 = vsyncpa [#allocation3], 0
    %7 = vsyncpa [#allocation4], 0
    // Predicated region
    $region2: #{tpu_custom_call.1} parent=1 // pred_check
      _
    $region3: #{tpu_custom_call.1} parent=1 // pred_check_branch
      %9 = sbr.rel (0) target = $region5
    $region4: #{tpu_custom_call.1} parent=1 // pred_region
      %11 = vsyncadd [#allocation3], 0
      %s13 = sshll.u32 %s0, 4
      %s14 = int_to_ptr.hbm [resolvable:$true] %s13
      %s15 = sshll.u32 [#allocation2], 4
      %s16 = int_to_ptr.vmem [resolvable:$true] %s15
      %18 = dma.hbm_to_vmem [thread:$0]  %s14, 32, %s16, [#allocation3]
    $region5: #{tpu_custom_call.1} parent=1 // pred_fallthru
      _
    // Predicated region
    $region6: #{tpu_custom_call.1} parent=1 // pred_check
      _
    $region7: #{tpu_custom_call.1} parent=1 // pred_check_branch
      %20 = sbr.rel (0) target = $region9
    $region8: #{tpu_custom_call.1} parent=1 // pred_region
      %22 = dma.done [#allocation3], 32
    $region9: #{tpu_custom_call.1} parent=1 // pred_fallthru
      _
    %v23 = vld [vmem:[#allocation2] sm:$0x3]
    %v24 = vlaneseq
    %vm25 = vcmp.ge.s32.totalorder %v24, 0
    %vm26 = vcmp.lt.s32.totalorder %v24, 256
    %vm27 = vmand %vm25, %vm26
    %28 = vst.msk [vmem:[#allocation5] sm:$0x3] %vm27, %v23
    %v29 = vand.u32 2147483647, %v23
    %vm30 = vcmp.le.f32.partialorder %v29, 0.7853982
    %vm31 = vcmp.lt.s32.totalorder %v23, 0
    %v32 = vand.u32 %v23, 2139095040
    %v33 = vshrl.u32 %v32, 23
    %v34 = vsub.s32 %v33, 127
    %v35 = vand.u32 2147483647, %v23
    %v36 = vand.u32 %v35, 8388607
    %v37 = vor.u32 %v36, 8388608
    %v38 = vsub.s32 0, %v37
    %v39 = vadd.s32 %v34, 1
    %vm40 = vcmp.gt.s32.totalorder %v39, 0
    %v41 = vsel %vm40, %v39, 0
    %v42 = vshrl.u32 %v41, 5
    %v43 = vand.u32 %v41, 31
    %v44 = vsub.s32 32, %v43
    %v45 = vshrl.u32 683565275, %v44
    %v46 = vshll.u32 683565275, %v43
    %v47 = vshrl.u32 2475754826, %v44
    %v48 = vor.u32 %v46, %v47
    %v49 = vshll.u32 2475754826, %v43
    %v50 = vshrl.u32 2131351028, %v44
    %v51 = vor.u32 %v49, %v50
    %v52 = vshll.u32 2131351028, %v43
    %v53 = vshrl.u32 2102212464, %v44
    %v54 = vor.u32 %v52, %v53
    %v55 = vshll.u32 2102212464, %v43
    %v56 = vshrl.u32 920167782, %v44
    %v57 = vor.u32 %v55, %v56
    %v58 = vshll.u32 920167782, %v43
    %v59 = vshrl.u32 1326507024, %v44
    %v60 = vor.u32 %v58, %v59
    %vm61 = vcmp.lt.s32.totalorder %v42, 1
    %vm62 = vcmp.lt.s32.totalorder %v42, 2
    %vm63 = vcmp.lt.s32.totalorder %v42, 3
    %vm64 = vcmp.lt.s32.totalorder %v42, 4
    %v65 = vsel %vm61, %v45, %v48
    %v66 = vsel %vm64, %v54, 2102212464
    %v67 = vsel %vm63, %v51, %v66
    %v68 = vsel %vm62, %v65, %v67
    %v69 = vsel %vm61, %v48, %v51
    %v70 = vsel %vm64, %v57, 920167782
    %v71 = vsel %vm63, %v54, %v70
    %v72 = vsel %vm62, %v69, %v71
    %v73 = vsel %vm61, %v51, %v54
    %v74 = vsel %vm64, %v60, 1326507024
    %v75 = vsel %vm63, %v57, %v74
    %v76 = vsel %vm62, %v73, %v75
    %v77 = vshll.u32 %v37, 8
    %v78 = vand.u32 %v77, 65535
    %v79 = vshrl.u32 %v77, 16
    %v80 = vand.u32 %v76, 65535
    %v81 = vshrl.u32 %v76, 16
    %v82 = vmul.u32 %v78, %v80
    %v83 = vmul.u32 %v78, %v81
    %v84 = vmul.u32 %v79, %v80
    %v85 = vmul.u32 %v79, %v81
    %v86 = vshll.u32 %v83, 16
    %v87 = vshrl.u32 %v83, 16
    %v88 = vshll.u32 %v84, 16
    %v89 = vshrl.u32 %v84, 16
    %vm90 = vc.u32 %v82, %v86
    %v91 = vsel %vm90, 1, 0
    %v92 = vadd.s32 %v82, %v86
    %v93 = vadd.s32 %v85, %v91
    %vm94 = vc.u32 %v92, %v88
    %v95 = vsel %vm94, 1, 0
    %v96 = vadd.s32 %v92, %v88
    %v97 = vadd.s32 %v93, %v95
    %v98 = vadd.s32 %v97, %v87
    %v99 = vadd.s32 %v98, %v89
    %v100 = vand.u32 %v77, 65535
    %v101 = vshrl.u32 %v77, 16
    %v102 = vand.u32 %v72, 65535
    %v103 = vshrl.u32 %v72, 16
    %v104 = vmul.u32 %v100, %v102
    %v105 = vmul.u32 %v100, %v103
    %v106 = vmul.u32 %v101, %v102
    %v107 = vmul.u32 %v101, %v103
    %v108 = vshll.u32 %v105, 16
    %v109 = vshrl.u32 %v105, 16
    %v110 = vshll.u32 %v106, 16
    %v111 = vshrl.u32 %v106, 16
    %vm112 = vc.u32 %v104, %v108
    %v113 = vsel %vm112, 1, 0
    %v114 = vadd.s32 %v104, %v108
    %v115 = vadd.s32 %v107, %v113
    %vm116 = vc.u32 %v114, %v110
    %v117 = vsel %vm116, 1, 0
    %v118 = vadd.s32 %v114, %v110
    %v119 = vadd.s32 %v115, %v117
    %v120 = vadd.s32 %v119, %v109
    %v121 = vadd.s32 %v120, %v111
    %v122 = vmul.u32 %v77, %v68
    %v123 = vadd.s32 %v99, %v118
    %vm124 = vc.u32 %v99, %v118
    %v125 = vadd.s32 %v121, 1
    %v126 = vsel %vm124, %v125, %v121
    %v127 = vadd.s32 %v122, %v126
    %v128 = vadd.s32 %v127, 536870912
    %v129 = vshrl.u32 %v128, 30
    %v130 = vshll.u32 %v129, 30
    %v131 = vsub.s32 %v127, %v130
    %vm132 = vcmp.lt.s32.totalorder %v131, 0
    %v133 = vsub.s32 0, %v131
    %v134 = vsel %vm132, %v133, %v131
    %v135 = vclz %v134
    %v136 = vsub.s32 %v135, 2
    %vm137 = vcmp.gt.s32.totalorder 0, %v136
    %v138 = vsel %vm137, 0, %v136
    %v139 = vsub.s32 32, %v138
    %v140 = vshll.u32 %v131, %v138
    %v141 = vshrl.u32 %v123, %v139
    %v142 = vor.u32 %v140, %v141
    %v143 = vsub.s32 4294967266, %v138
    %v144 = vadd.s32 %v143, 127
    %v145 = vshll.u32 %v144, 23
    %v146 = vor.u32 4788187, %v145
    %v147 = vand.u32 2147483647, %v146
    %v149 = vcvt.s32.f32 %v142
    %v150 = vmul.f32 %v149, %v147
    %v151 = vxor.u32 %v150, 2147483648
    %v152 = vsel %vm31, %v151, %v150
    %v153 = vsub.s32 4, %v129
    %v154 = vsel %vm31, %v153, %v129
    %v155 = vsel %vm30, %v23, %v152
    %v156 = vsel %vm30, 0, %v154
    %v157 = vmul.f32 %v155, %v155
    %v158 = vmul.f32 %v157, -0.001358992
    %v159 = vadd.f32 %v158, 0.041655596
    %v160 = vmul.f32 %v157, %v159
    %v161 = vadd.f32 %v160, -0.4999988
    %v162 = vmul.f32 %v157, %v161
    %v163 = vadd.f32 1.0, %v162
    %v164 = vmul.f32 %v155, %v155
    %v165 = vmul.f32 %v164, -0.00019511016
    %v166 = vadd.f32 %v165, 0.008332121
    %v167 = vmul.f32 %v164, %v166
    %v168 = vadd.f32 %v167, -0.16666654
    %v169 = vmul.f32 %v164, %v168
    %v170 = vadd.f32 %v169, 1.0
    %v171 = vmul.f32 %v170, %v155
    %vm172 = vweird.f32 %v23
    %v173 = vadd.s32 %v156, 3
    %v174 = vand.u32 %v173, 3
    %vm175 = vcmp.lt.s32.totalorder %v174, 2
    %vm176 = vcmp.eq.s32.totalorder %v174, 0
    %v177 = vxor.u32 %v171, 2147483648
    %v178 = vsel %vm176, %v163, %v177
    %vm179 = vcmp.eq.s32.totalorder %v174, 2
    %v180 = vxor.u32 %v163, 2147483648
    %v181 = vsel %vm179, %v180, %v171
    %v182 = vsel %vm175, %v178, %v181
    %v183 = vsel %vm172, nan, %v182
    %v184 = vand.u32 2147483647, %v23
    %vm185 = vcmp.le.f32.partialorder %v184, 0.7853982
    %vm186 = vcmp.lt.s32.totalorder %v23, 0
    %v187 = vand.u32 %v23, 2139095040
    %v188 = vshrl.u32 %v187, 23
    %v189 = vsub.s32 %v188, 127
    %v190 = vand.u32 2147483647, %v23
    %v191 = vand.u32 %v190, 8388607
    %v192 = vor.u32 %v191, 8388608
    %v193 = vsub.s32 0, %v192
    %v194 = vadd.s32 %v189, 1
    %vm195 = vcmp.gt.s32.totalorder %v194, 0
    %v196 = vsel %vm195, %v194, 0
    %v197 = vshrl.u32 %v196, 5
    %v198 = vand.u32 %v196, 31
    %v199 = vsub.s32 32, %v198
    %v200 = vshrl.u32 683565275, %v199
    %v201 = vshll.u32 683565275, %v198
    %v202 = vshrl.u32 2475754826, %v199
    %v203 = vor.u32 %v201, %v202
    %v204 = vshll.u32 2475754826, %v198
    %v205 = vshrl.u32 2131351028, %v199
    %v206 = vor.u32 %v204, %v205
    %v207 = vshll.u32 2131351028, %v198
    %v208 = vshrl.u32 2102212464, %v199
    %v209 = vor.u32 %v207, %v208
    %v210 = vshll.u32 2102212464, %v198
    %v211 = vshrl.u32 920167782, %v199
    %v212 = vor.u32 %v210, %v211
    %v213 = vshll.u32 920167782, %v198
    %v214 = vshrl.u32 1326507024, %v199
    %v215 = vor.u32 %v213, %v214
    %vm216 = vcmp.lt.s32.totalorder %v197, 1
    %vm217 = vcmp.lt.s32.totalorder %v197, 2
    %vm218 = vcmp.lt.s32.totalorder %v197, 3
    %vm219 = vcmp.lt.s32.totalorder %v197, 4
    %v220 = vsel %vm216, %v200, %v203
    %v221 = vsel %vm219, %v209, 2102212464
    %v222 = vsel %vm218, %v206, %v221
    %v223 = vsel %vm217, %v220, %v222
    %v224 = vsel %vm216, %v203, %v206
    %v225 = vsel %vm219, %v212, 920167782
    %v226 = vsel %vm218, %v209, %v225
    %v227 = vsel %vm217, %v224, %v226
    %v228 = vsel %vm216, %v206, %v209
    %v229 = vsel %vm219, %v215, 1326507024
    %v230 = vsel %vm218, %v212, %v229
    %v231 = vsel %vm217, %v228, %v230
    %v232 = vshll.u32 %v192, 8
    %v233 = vand.u32 %v232, 65535
    %v234 = vshrl.u32 %v232, 16
    %v235 = vand.u32 %v231, 65535
    %v236 = vshrl.u32 %v231, 16
    %v237 = vmul.u32 %v233, %v235
    %v238 = vmul.u32 %v233, %v236
    %v239 = vmul.u32 %v234, %v235
    %v240 = vmul.u32 %v234, %v236
    %v241 = vshll.u32 %v238, 16
    %v242 = vshrl.u32 %v238, 16
    %v243 = vshll.u32 %v239, 16
    %v244 = vshrl.u32 %v239, 16
    %vm245 = vc.u32 %v237, %v241
    %v246 = vsel %vm245, 1, 0
    %v247 = vadd.s32 %v237, %v241
    %v248 = vadd.s32 %v240, %v246
    %vm249 = vc.u32 %v247, %v243
    %v250 = vsel %vm249, 1, 0
    %v251 = vadd.s32 %v247, %v243
    %v252 = vadd.s32 %v248, %v250
    %v253 = vadd.s32 %v252, %v242
    %v254 = vadd.s32 %v253, %v244
    %v255 = vand.u32 %v232, 65535
    %v256 = vshrl.u32 %v232, 16
    %v257 = vand.u32 %v227, 65535
    %v258 = vshrl.u32 %v227, 16
    %v259 = vmul.u32 %v255, %v257
    %v260 = vmul.u32 %v255, %v258
    %v261 = vmul.u32 %v256, %v257
    %v262 = vmul.u32 %v256, %v258
    %v263 = vshll.u32 %v260, 16
    %v264 = vshrl.u32 %v260, 16
    %v265 = vshll.u32 %v261, 16
    %v266 = vshrl.u32 %v261, 16
    %vm267 = vc.u32 %v259, %v263
    %v268 = vsel %vm267, 1, 0
    %v269 = vadd.s32 %v259, %v263
    %v270 = vadd.s32 %v262, %v268
    %vm271 = vc.u32 %v269, %v265
    %v272 = vsel %vm271, 1, 0
    %v273 = vadd.s32 %v269, %v265
    %v274 = vadd.s32 %v270, %v272
    %v275 = vadd.s32 %v274, %v264
    %v276 = vadd.s32 %v275, %v266
    %v277 = vmul.u32 %v232, %v223
    %v278 = vadd.s32 %v254, %v273
    %vm279 = vc.u32 %v254, %v273
    %v280 = vadd.s32 %v276, 1
    %v281 = vsel %vm279, %v280, %v276
    %v282 = vadd.s32 %v277, %v281
    %v283 = vadd.s32 %v282, 536870912
    %v284 = vshrl.u32 %v283, 30
    %v285 = vshll.u32 %v284, 30
    %v286 = vsub.s32 %v282, %v285
    %vm287 = vcmp.lt.s32.totalorder %v286, 0
    %v288 = vsub.s32 0, %v286
    %v289 = vsel %vm287, %v288, %v286
    %v290 = vclz %v289
    %v291 = vsub.s32 %v290, 2
    %vm292 = vcmp.gt.s32.totalorder 0, %v291
    %v293 = vsel %vm292, 0, %v291
    %v294 = vsub.s32 32, %v293
    %v295 = vshll.u32 %v286, %v293
    %v296 = vshrl.u32 %v278, %v294
    %v297 = vor.u32 %v295, %v296
    %v298 = vsub.s32 4294967266, %v293
    %v299 = vadd.s32 %v298, 127
    %v300 = vshll.u32 %v299, 23
    %v301 = vor.u32 4788187, %v300
    %v302 = vand.u32 2147483647, %v301
    %v304 = vcvt.s32.f32 %v297
    %v305 = vmul.f32 %v304, %v302
    %v306 = vxor.u32 %v305, 2147483648
    %v307 = vsel %vm186, %v306, %v305
    %v308 = vsub.s32 4, %v284
    %v309 = vsel %vm186, %v308, %v284
    %v310 = vsel %vm185, %v23, %v307
    %v311 = vsel %vm185, 0, %v309
    %v312 = vmul.f32 %v310, %v310
    %v313 = vmul.f32 %v312, -0.001358992
    %v314 = vadd.f32 %v313, 0.041655596
    %v315 = vmul.f32 %v312, %v314
    %v316 = vadd.f32 %v315, -0.4999988
    %v317 = vmul.f32 %v312, %v316
    %v318 = vadd.f32 1.0, %v317
    %v319 = vmul.f32 %v310, %v310
    %v320 = vmul.f32 %v319, -0.00019511016
    %v321 = vadd.f32 %v320, 0.008332121
    %v322 = vmul.f32 %v319, %v321
    %v323 = vadd.f32 %v322, -0.16666654
    %v324 = vmul.f32 %v319, %v323
    %v325 = vadd.f32 %v324, 1.0
    %v326 = vmul.f32 %v325, %v310
    %vm327 = vweird.f32 %v23
    %v328 = vand.u32 %v311, 3
    %vm329 = vcmp.lt.s32.totalorder %v328, 2
    %vm330 = vcmp.eq.s32.totalorder %v328, 0
    %v331 = vxor.u32 %v326, 2147483648
    %v332 = vsel %vm330, %v318, %v331
    %vm333 = vcmp.eq.s32.totalorder %v328, 2
    %v334 = vxor.u32 %v318, 2147483648
    %v335 = vsel %vm333, %v334, %v326
    %v336 = vsel %vm329, %v332, %v335
    %v337 = vsel %vm327, nan, %v336
    %s338 = scalar_lea.vmem [#allocation5], 2
    %339 = vst.msk [vmem:[%s338] sm:$0x3] %vm27, %v183
    %s340 = scalar_lea.vmem [#allocation5], 4
    %341 = vst.msk [vmem:[%s340] sm:$0x3] %vm27, %v337
    %v342 = vmul.f32 %v183, 2.0
    %v343 = vmul.f32 %v342, %v337
    %v344 = vsub.f32 %v337, %v183
    %v345 = vadd.f32 %v337, %v183
    %v346 = vmul.f32 %v344, %v345
    %s347 = scalar_lea.vmem [#allocation5], 6
    %348 = vst.msk [vmem:[%s347] sm:$0x3] %vm27, %v343
    %s349 = scalar_lea.vmem [#allocation5], 8
    %350 = vst.msk [vmem:[%s349] sm:$0x3] %vm27, %v346
    %v351 = vmul.f32 %v343, 2.0
    %v352 = vmul.f32 %v351, %v346
    %v353 = vsub.f32 %v346, %v343
    %v354 = vadd.f32 %v346, %v343
    %v355 = vmul.f32 %v353, %v354
    %s356 = scalar_lea.vmem [#allocation5], 10
    %357 = vst.msk [vmem:[%s356] sm:$0x3] %vm27, %v352
    %s358 = scalar_lea.vmem [#allocation5], 12
    %359 = vst.msk [vmem:[%s358] sm:$0x3] %vm27, %v355
    %v360 = vmul.f32 %v352, 2.0
    %v361 = vmul.f32 %v360, %v355
    %v362 = vsub.f32 %v355, %v352
    %v363 = vadd.f32 %v355, %v352
    %v364 = vmul.f32 %v362, %v363
    %s365 = scalar_lea.vmem [#allocation5], 14
    %366 = vst.msk [vmem:[%s365] sm:$0x3] %vm27, %v361
    %s367 = scalar_lea.vmem [#allocation5], 16
    %368 = vst.msk [vmem:[%s367] sm:$0x3] %vm27, %v364
    // Predicated region
    $region10: #{tpu_custom_call.1} parent=1 // pred_check
      _
    $region11: #{tpu_custom_call.1} parent=1 // pred_check_branch
      %370 = sbr.rel (0) target = $region13
    $region12: #{tpu_custom_call.1} parent=1 // pred_region
      %372 = vsyncadd [#allocation4], 0
      %s373 = sshll.u32 [#allocation5], 4
      %s374 = int_to_ptr.vmem [resolvable:$true] %s373
      %s375 = sshll.u32 %s1, 4
      %s376 = int_to_ptr.hbm [resolvable:$true] %s375
      %381 = dma.vmem_to_hbm [thread:$0]  %s374, 288, %s376, [#allocation4], 32, 32, 2
    $region13: #{tpu_custom_call.1} parent=1 // pred_fallthru
      _
    // Predicated region
    $region14: #{tpu_custom_call.1} parent=1 // pred_check
      _
    $region15: #{tpu_custom_call.1} parent=1 // pred_check_branch
      %383 = sbr.rel (0) target = $region17
    $region16: #{tpu_custom_call.1} parent=1 // pred_region
      %385 = dma.done [#allocation4], 288
    $region17: #{tpu_custom_call.1} parent=1 // pred_fallthru
      _
    %386 = vsyncpa [#allocation3], 1
    %387 = vsyncpa [#allocation4], 1

</llo_original>
